<compile_context>
chip_gen: v7x
topology: tpu7x:2x2x1
jax: 0.10.0
libtpu: 0.0.40
codegen_flags: <defaults>
</compile_context>

<pallas_src>
import functools

import jax
import jax.numpy as jnp
from jax.experimental import pallas as pl
from jax.experimental.pallas import tpu as pltpu

_LANE = 128


def _round_up(n, m):
    return ((n + m - 1) // m) * m


def _vcdn_kernel(v12_ref, e1_ref, e2_ref, w1_ref, b1_ref, w2_ref, b2_ref,
                 out_ref, *, matmul_dtype):
    # sigmoid via tanh (single EUP op, mathematically exact): 0.5*(tanh(x/2)+1)
    v12 = 0.5 * (jnp.tanh(0.5 * v12_ref[...]) + 1.0)          # (TB, 2C) f32
    v12m = v12.astype(matmul_dtype)

    # Expand to the flattened outer-product layout via constant 0/1 matmuls:
    #   v1e[b, i*C+j] = v1[b, i],   v2e[b, i*C+j] = v2[b, j]
    v1e = jnp.dot(v12m, e1_ref[...], preferred_element_type=jnp.float32)  # (TB, C*C)
    v2e = jnp.dot(v12m, e2_ref[...], preferred_element_type=jnp.float32)  # (TB, C*C)
    feat = v1e * v2e                                           # pure VPU, (TB, C*C)

    # Linear1 + LeakyReLU(0.25)
    h = jnp.dot(feat.astype(matmul_dtype), w1_ref[...],
                preferred_element_type=jnp.float32) + b1_ref[...]         # (TB, Hp)
    h = jnp.where(h >= 0.0, h, 0.25 * h)

    # Linear2; output lanes padded to 128 -> unmasked lane-dense store.
    out = jnp.dot(h.astype(matmul_dtype), w2_ref[...],
                  preferred_element_type=jnp.float32) + b2_ref[...]       # (TB, Op)
    out_ref[...] = out.astype(out_ref.dtype)


def vcdn_forward(views, w1, b1, w2, b2, num_cls, hvcdn_dim, *,
                 batch_tile=None, matmul_dtype=jnp.bfloat16):
    """views: list of 2 arrays (B, num_cls). w1: (num_cls**2, hvcdn_dim),
    b1: (hvcdn_dim,), w2: (hvcdn_dim, num_cls), b2: (num_cls,).
    Weight layout is math layout (in, out), i.e. PyTorch Linear.weight.T."""
    # TODO(synk): kernel implements the 2-view VCDN path only.
    assert len(views) == 2
    v1, v2 = views
    B, C = v1.shape
    H = hvcdn_dim
    F = C * C
    assert C == num_cls and w1.shape == (F, H) and w2.shape == (H, C)

    Hp = _round_up(max(H, _LANE), _LANE)       # hidden padded to 128 lanes
    Op = _round_up(max(C, _LANE), _LANE)       # padded output -> lane-dense store

    # Constant expand matrices, stacked so the kernel needs no lane slicing:
    #   (v12 @ e1p)[b, i*C+j] = v1[b, i],  (v12 @ e2p)[b, i*C+j] = v2[b, j]
    eyeC = jnp.eye(C, dtype=jnp.float32)
    e1 = jnp.repeat(eyeC, C, axis=1)                       # (C, F), e1[i, i*C+j]=1
    e2 = jnp.tile(eyeC, (1, C))                            # (C, F), e2[j, i*C+j]=1
    zF = jnp.zeros((C, F), dtype=jnp.float32)
    e1p = jnp.concatenate([e1, zF], axis=0).astype(matmul_dtype)   # (2C, F)
    e2p = jnp.concatenate([zF, e2], axis=0).astype(matmul_dtype)   # (2C, F)

    # Layer weights, padded to 128-lane multiples, cast for the MXU.
    w1p = jnp.pad(w1, ((0, 0), (0, Hp - H))).astype(matmul_dtype)          # (F, Hp)
    b1p = jnp.pad(b1, (0, Hp - H)).reshape(1, Hp).astype(jnp.float32)
    w2p = jnp.pad(w2, ((0, Hp - H), (0, Op - C))).astype(matmul_dtype)     # (Hp, Op)
    b2p = jnp.pad(b2, (0, Op - C)).reshape(1, Op).astype(jnp.float32)

    # Batch tiling: two balanced tiles by default (megacore / 2-TC friendly on
    # v7x, near-free extra grid step on single-TC v5e/v6e); cap TB for huge B.
    if batch_tile is None:
        TB = max(8, _round_up(pl.cdiv(B, 2), 8))
        TB = min(TB, 1024)
    else:
        TB = batch_tile
    n_tiles = pl.cdiv(B, TB)
    Bp = n_tiles * TB

    # Single concatenated activation input -> one tiled DMA per grid step.
    v12 = jnp.concatenate([v1, v2], axis=1).astype(jnp.float32)            # (B, 2C)
    if Bp != B:
        v12 = jnp.pad(v12, ((0, Bp - B), (0, 0)))

    itemsize = jnp.dtype(matmul_dtype).itemsize
    flops = (2 * Bp * (2 * (2 * C) * F + F * Hp + Hp * Op)
             + Bp * (F + 3 * Hp + Op + 6 * C))
    bytes_accessed = (v12.size * 4
                      + (e1p.size + e2p.size + w1p.size + w2p.size) * itemsize
                      + (b1p.size + b2p.size) * 4
                      + Bp * Op * 4)

    kernel = functools.partial(_vcdn_kernel, matmul_dtype=matmul_dtype)

    out_p = pl.pallas_call(
        kernel,
        out_shape=jax.ShapeDtypeStruct((Bp, Op), jnp.float32),
        grid=(n_tiles,),
        in_specs=[
            pl.BlockSpec((TB, 2 * C), lambda i: (i, 0)),     # v12 (tiled over B)
            pl.BlockSpec((2 * C, F), lambda i: (0, 0)),      # e1  (VMEM-resident)
            pl.BlockSpec((2 * C, F), lambda i: (0, 0)),      # e2  (VMEM-resident)
            pl.BlockSpec((F, Hp), lambda i: (0, 0)),         # W1  (VMEM-resident)
            pl.BlockSpec((1, Hp), lambda i: (0, 0)),         # b1  (VMEM-resident)
            pl.BlockSpec((Hp, Op), lambda i: (0, 0)),        # W2  (VMEM-resident)
            pl.BlockSpec((1, Op), lambda i: (0, 0)),         # b2  (VMEM-resident)
        ],
        out_specs=pl.BlockSpec((TB, Op), lambda i: (i, 0)),
        compiler_params=pltpu.CompilerParams(
            dimension_semantics=("parallel",)),              # batch axis independent
        cost_estimate=pl.CostEstimate(
            flops=int(flops),
            transcendentals=int(Bp * 2 * C),
            bytes_accessed=int(bytes_accessed)),
    )(v12, e1p, e2p, w1p, b1p, w2p, b2p)

    return out_p[:B, :C]


def _xavier_normal(key, fan_in, fan_out):
    std = (2.0 / (fan_in + fan_out)) ** 0.5
    return std * jax.random.normal(key, (fan_in, fan_out), dtype=jnp.float32)


def _reference(views, w1, b1, w2, b2, num_cls):
    # pure-JAX mirror of the PyTorch forward (2 views)
    v1 = jax.nn.sigmoid(views[0])
    v2 = jax.nn.sigmoid(views[1])
    feat = jnp.matmul(v1[:, :, None], v2[:, None, :]).reshape(-1, num_cls * num_cls)
    h = feat @ w1 + b1
    h = jnp.where(h >= 0.0, h, 0.25 * h)     # LeakyReLU(0.25)
    return h @ w2 + b2


if __name__ == "__main__":
    num_cls = 8        # number of classes
    num_views = 2
    hvcdn_dim = 32     # hidden dim of the VCDN MLP
    batch = 200        # deliberately not a multiple of 8 / the default tile

    key = jax.random.PRNGKey(0)
    k1, k2, k3, k4 = jax.random.split(key, 4)

    # deterministic synthetic "GCN logits" for each view
    view1 = jax.random.normal(k1, (batch, num_cls), dtype=jnp.float32)
    view2 = jax.random.normal(k2, (batch, num_cls), dtype=jnp.float32)

    # deterministic Xavier-normal weights, zero biases (matches xavier_init)
    in_dim = num_cls ** num_views
    w1 = _xavier_normal(k3, in_dim, hvcdn_dim)      # (C*C, H) math-layout
    b1 = jnp.zeros((hvcdn_dim,), dtype=jnp.float32)
    w2 = _xavier_normal(k4, hvcdn_dim, num_cls)     # (H, C) math-layout
    b2 = jnp.zeros((num_cls,), dtype=jnp.float32)

    ref = _reference([view1, view2], w1, b1, w2, b2, num_cls)

    # Default path: bf16 matmul operands, f32 accumulation / elementwise.
    out_bf16 = vcdn_forward([view1, view2], w1, b1, w2, b2, num_cls, hvcdn_dim)
    out_bf16 = jax.block_until_ready(out_bf16)
    assert out_bf16.shape == (batch, num_cls)
    assert jnp.allclose(out_bf16, ref, atol=2e-2, rtol=2e-2), (
        float(jnp.max(jnp.abs(out_bf16 - ref))))

    # Tight-tolerance f32 verification path.
    out_f32 = vcdn_forward([view1, view2], w1, b1, w2, b2, num_cls, hvcdn_dim,
                           matmul_dtype=jnp.float32)
    out_f32 = jax.block_until_ready(out_f32)
    assert jnp.allclose(out_f32, ref, atol=1e-4, rtol=1e-4), (
        float(jnp.max(jnp.abs(out_f32 - ref))))

    print("KERNEL_OK")
</pallas_src>

<mosaic_0001>
module attributes {stable_mosaic.version = 11 : i64} {
  func.func @_vcdn_kernel(%arg0: i32, %arg1: memref<104x16xf32, #tpu.memory_space<vmem>>, %arg2: memref<16x64xbf16, #tpu.memory_space<vmem>>, %arg3: memref<16x64xbf16, #tpu.memory_space<vmem>>, %arg4: memref<64x128xbf16, #tpu.memory_space<vmem>>, %arg5: memref<1x128xf32, #tpu.memory_space<vmem>>, %arg6: memref<128x128xbf16, #tpu.memory_space<vmem>>, %arg7: memref<1x128xf32, #tpu.memory_space<vmem>>, %arg8: memref<104x128xf32, #tpu.memory_space<vmem>>) attributes {dimension_semantics = [#tpu.dimension_semantics<parallel>], iteration_bounds = array<i64: 2>, scalar_prefetch = 0 : i64, scratch_operands = 0 : i64, tpu.core_type = #tpu.core_type<tc>, window_params = [{transform_indices = @transform_0, window_bounds = array<i64: 104, 16>}, {pipeline_mode = #tpu.pipeline_mode<synchronous>, transform_indices = @transform_1, window_bounds = array<i64: 16, 64>}, {pipeline_mode = #tpu.pipeline_mode<synchronous>, transform_indices = @transform_2, window_bounds = array<i64: 16, 64>}, {pipeline_mode = #tpu.pipeline_mode<synchronous>, transform_indices = @transform_3, window_bounds = array<i64: 64, 128>}, {pipeline_mode = #tpu.pipeline_mode<synchronous>, transform_indices = @transform_4, window_bounds = array<i64: 1, 128>}, {pipeline_mode = #tpu.pipeline_mode<synchronous>, transform_indices = @transform_5, window_bounds = array<i64: 128, 128>}, {pipeline_mode = #tpu.pipeline_mode<synchronous>, transform_indices = @transform_6, window_bounds = array<i64: 1, 128>}, {transform_indices = @transform_7, window_bounds = array<i64: 104, 128>}]} {
    %c0 = arith.constant 0 : index
    %c0_0 = arith.constant 0 : index
    %0 = vector.load %arg1[%c0, %c0_0] : memref<104x16xf32, #tpu.memory_space<vmem>>, vector<104x16xf32>
    %cst = arith.constant 5.000000e-01 : f32
    %1 = vector.broadcast %cst : f32 to vector<104x16xf32>
    %2 = arith.mulf %1, %0 : vector<104x16xf32>
    %3 = math.tanh %2 : vector<104x16xf32>
    %cst_1 = arith.constant 1.000000e+00 : f32
    %4 = vector.broadcast %cst_1 : f32 to vector<104x16xf32>
    %5 = arith.addf %3, %4 : vector<104x16xf32>
    %cst_2 = arith.constant 5.000000e-01 : f32
    %6 = vector.broadcast %cst_2 : f32 to vector<104x16xf32>
    %7 = arith.mulf %6, %5 : vector<104x16xf32>
    %8 = arith.truncf %7 : vector<104x16xf32> to vector<104x16xbf16>
    %c0_3 = arith.constant 0 : index
    %c0_4 = arith.constant 0 : index
    %9 = vector.load %arg2[%c0_3, %c0_4] : memref<16x64xbf16, #tpu.memory_space<vmem>>, vector<16x64xbf16>
    %cst_5 = arith.constant dense<0.000000e+00> : vector<104x64xf32>
    %10 = tpu.matmul %8, %9, %cst_5 {dimension_numbers = #tpu.dot_dimension_numbers<[1], [0], [0], [1], [0, 0, 1, 1], [], []>} : vector<104x16xbf16>, vector<16x64xbf16>, vector<104x64xf32> -> vector<104x64xf32>
    %c0_6 = arith.constant 0 : index
    %c0_7 = arith.constant 0 : index
    %11 = vector.load %arg3[%c0_6, %c0_7] : memref<16x64xbf16, #tpu.memory_space<vmem>>, vector<16x64xbf16>
    %cst_8 = arith.constant dense<0.000000e+00> : vector<104x64xf32>
    %12 = tpu.matmul %8, %11, %cst_8 {dimension_numbers = #tpu.dot_dimension_numbers<[1], [0], [0], [1], [0, 0, 1, 1], [], []>} : vector<104x16xbf16>, vector<16x64xbf16>, vector<104x64xf32> -> vector<104x64xf32>
    %13 = arith.mulf %10, %12 : vector<104x64xf32>
    %14 = arith.truncf %13 : vector<104x64xf32> to vector<104x64xbf16>
    %c0_9 = arith.constant 0 : index
    %c0_10 = arith.constant 0 : index
    %15 = vector.load %arg4[%c0_9, %c0_10] : memref<64x128xbf16, #tpu.memory_space<vmem>>, vector<64x128xbf16>
    %cst_11 = arith.constant dense<0.000000e+00> : vector<104x128xf32>
    %16 = tpu.matmul %14, %15, %cst_11 {dimension_numbers = #tpu.dot_dimension_numbers<[1], [0], [0], [1], [0, 0, 1, 1], [], []>} : vector<104x64xbf16>, vector<64x128xbf16>, vector<104x128xf32> -> vector<104x128xf32>
    %c0_12 = arith.constant 0 : index
    %c0_13 = arith.constant 0 : index
    %17 = vector.load %arg5[%c0_12, %c0_13] : memref<1x128xf32, #tpu.memory_space<vmem>>, vector<1x128xf32>
    %18 = vector.broadcast %17 : vector<1x128xf32> to vector<104x128xf32>
    %19 = arith.addf %16, %18 : vector<104x128xf32>
    %cst_14 = arith.constant 0.000000e+00 : f32
    %20 = vector.broadcast %cst_14 : f32 to vector<104x128xf32>
    %21 = arith.cmpf oge, %19, %20 : vector<104x128xf32>
    %cst_15 = arith.constant 2.500000e-01 : f32
    %22 = vector.broadcast %cst_15 : f32 to vector<104x128xf32>
    %23 = arith.mulf %22, %19 : vector<104x128xf32>
    %24 = arith.select %21, %19, %23 : vector<104x128xi1>, vector<104x128xf32>
    %25 = arith.truncf %24 : vector<104x128xf32> to vector<104x128xbf16>
    %c0_16 = arith.constant 0 : index
    %c0_17 = arith.constant 0 : index
    %26 = vector.load %arg6[%c0_16, %c0_17] : memref<128x128xbf16, #tpu.memory_space<vmem>>, vector<128x128xbf16>
    %cst_18 = arith.constant dense<0.000000e+00> : vector<104x128xf32>
    %27 = tpu.matmul %25, %26, %cst_18 {dimension_numbers = #tpu.dot_dimension_numbers<[1], [0], [0], [1], [0, 0, 1, 1], [], []>} : vector<104x128xbf16>, vector<128x128xbf16>, vector<104x128xf32> -> vector<104x128xf32>
    %c0_19 = arith.constant 0 : index
    %c0_20 = arith.constant 0 : index
    %28 = vector.load %arg7[%c0_19, %c0_20] : memref<1x128xf32, #tpu.memory_space<vmem>>, vector<1x128xf32>
    %29 = vector.broadcast %28 : vector<1x128xf32> to vector<104x128xf32>
    %30 = arith.addf %27, %29 : vector<104x128xf32>
    %c0_21 = arith.constant 0 : index
    %c0_22 = arith.constant 0 : index
    %31 = vector.load %arg8[%c0_21, %c0_22] : memref<104x128xf32, #tpu.memory_space<vmem>>, vector<104x128xf32>
    tpu.vector_store %arg8[%c0_21, %c0_22], %30 {strides = array<i32>} : memref<104x128xf32, #tpu.memory_space<vmem>>, vector<104x128xf32>,
    return
  }
  func.func @transform_0(%arg0: i32) -> (i32, i32) {
    %c0_i32 = arith.constant 0 : i32
    %c0_i32_0 = arith.constant 0 : i32
    return %arg0, %c0_i32 : i32, i32
  }
  func.func @transform_1(%arg0: i32) -> (i32, i32) {
    %c0_i32 = arith.constant 0 : i32
    %c0_i32_0 = arith.constant 0 : i32
    %c0_i32_1 = arith.constant 0 : i32
    return %c0_i32, %c0_i32_0 : i32, i32
  }
  func.func @transform_2(%arg0: i32) -> (i32, i32) {
    %c0_i32 = arith.constant 0 : i32
    %c0_i32_0 = arith.constant 0 : i32
    %c0_i32_1 = arith.constant 0 : i32
    return %c0_i32, %c0_i32_0 : i32, i32
  }
  func.func @transform_3(%arg0: i32) -> (i32, i32) {
    %c0_i32 = arith.constant 0 : i32
    %c0_i32_0 = arith.constant 0 : i32
    %c0_i32_1 = arith.constant 0 : i32
    return %c0_i32, %c0_i32_0 : i32, i32
  }
  func.func @transform_4(%arg0: i32) -> (i32, i32) {
    %c0_i32 = arith.constant 0 : i32
    %c0_i32_0 = arith.constant 0 : i32
    %c0_i32_1 = arith.constant 0 : i32
    return %c0_i32, %c0_i32_0 : i32, i32
  }
  func.func @transform_5(%arg0: i32) -> (i32, i32) {
    %c0_i32 = arith.constant 0 : i32
    %c0_i32_0 = arith.constant 0 : i32
    %c0_i32_1 = arith.constant 0 : i32
    return %c0_i32, %c0_i32_0 : i32, i32
  }
  func.func @transform_6(%arg0: i32) -> (i32, i32) {
    %c0_i32 = arith.constant 0 : i32
    %c0_i32_0 = arith.constant 0 : i32
    %c0_i32_1 = arith.constant 0 : i32
    return %c0_i32, %c0_i32_0 : i32, i32
  }
  func.func @transform_7(%arg0: i32) -> (i32, i32) {
    %c0_i32 = arith.constant 0 : i32
    %c0_i32_0 = arith.constant 0 : i32
    return %arg0, %c0_i32 : i32, i32
  }
}

</mosaic_0001>

<llo_original>
// kernel: tpu_custom_call.1
$region0: #{tpu_custom_call.1}
  #allocation0 [shape = 'u32[]', space=smem, size = 0x4, offset = 0x4, fixed_abs, tag = 'smem constant byte address 0x4 - core index']
  #allocation1 [shape = 'u32[144,128]{1,0:T(1,128)}', space=vmem, size = 0x12000, scoped, tag = 'internal scratch']
  %s0 = inlined_call_operand.vmem [shape: f32[208,16], index: 0, kind: input, shape index: {}]
  %s1 = inlined_call_operand.vmem [shape: bf16[16,64], index: 1, kind: input, shape index: {}]
  %s2 = inlined_call_operand.vmem [shape: bf16[16,64], index: 2, kind: input, shape index: {}]
  %s3 = inlined_call_operand.vmem [shape: bf16[64,128], index: 3, kind: input, shape index: {}]
  %s4 = inlined_call_operand.vmem [shape: f32[1,128], index: 4, kind: input, shape index: {}]
  %s5 = inlined_call_operand.vmem [shape: bf16[128,128], index: 5, kind: input, shape index: {}]
  %s6 = inlined_call_operand.vmem [shape: f32[1,128], index: 6, kind: input, shape index: {}]
  %s7 = inlined_call_operand.hbm [shape: f32[208,128], index: 7, kind: output, shape index: {}]
  %s8 = sld [smem:[#allocation0]]
  $region61: #{tpu_custom_call.1} parent=0
    _
  %s10 = ssub.s32 1, %s8
  %s11 = scalar_select 0, %s10, %s8
  $region1: #{tpu_custom_call.1} parent=0
    #allocation2 [shape = 'u8[106496]{0}', space=vmem, size = 0x1a000, scoped, tag = 'output window, operand 0']
    #allocation3 [shape = 's32[2]{0}', space=sflag, size = 0x8, scoped, tag = 'scoped memory for tpu_custom_call.1']
    %12 = vsyncpa [#allocation3], 0
    %s13 = scalar_lea.sflag [#allocation3], 1
    %14 = vsyncpa %s13, 0
    loop: start=0, step=1, limit=4
    $region2: #{tpu_custom_call.1} parent=1 // loop_pre_header
      _
    $region3: #{tpu_custom_call.1} parent=1 // loop_header
      %s16 = sphi 0, %s20
      %p17 = scmp.ge.s32.totalorder %s16, 4
      %s26 = sphi 0, %s28
      %s29 = sphi 0, %s26
      %s30 = sphi 0, %s29
      %s46 = sphi 0, %s30
      %s50 = sphi 0, %s50
      %s52 = sphi 0, %s50
      %s53 = sphi 0, %s52
      %s67 = sphi 0, %s53
      %s71 = sphi 0, %s71
      %s73 = sphi 0, %s71
      %s74 = sphi 0, %s73
      %s88 = sphi 0, %s74
      %s92 = sphi 0, %s92
      %s94 = sphi 0, %s92
      %s95 = sphi 0, %s94
      %s109 = sphi 0, %s95
      %s113 = sphi 0, %s113
      %s115 = sphi 0, %s113
      %s116 = sphi 0, %s115
      %s130 = sphi 0, %s116
      %s134 = sphi 0, %s134
      %s136 = sphi 0, %s134
      %s137 = sphi 0, %s136
      %s151 = sphi 0, %s137
      %s155 = sphi 0, %s155
      %s157 = sphi 0, %s155
      %s158 = sphi 0, %s157
      %s172 = sphi 0, %s158
      %s178 = sphi 0, %s180
      %s181 = sphi 0, %s178
      %s182 = sphi 0, %s181
      %s198 = sphi 0, %s182
    $region4: #{tpu_custom_call.1} parent=1 // loop_header_branch
      %19 = sbr.rel (%p17) target = $region8
    $region5: #{tpu_custom_call.1} parent=1 // loop_body
      %s21 = ssub.s32 %s16, 1
      %s22 = ssub.s32 %s16, 2
      %s23 = sadd.s32 %s16, 1
      %s24 = ssub.s32 %s16, %s23
      %p25 = scmp.eq.s32.totalorder %s24, 0
      %s27 = sadd.s32 %s26, 1
      %s28 = scalar_select %p25, %s26, %s27
      %p31 = pneg %p25
      %p32 = scmp.eq.s32.totalorder %s16, 1
      %p33 = por %p31, %p32
      %p34 = scmp.ne.s32.totalorder %s26, %s29
      %p35 = scmp.eq.s32.totalorder %s16, 0
      %p36 = por %p34, %p35
      %p37 = scmp.ne.s32.totalorder %s26, %s29
      %p38 = scmp.eq.s32.totalorder %s21, 1
      %p39 = por %p37, %p38
      %p40 = scmp.ne.s32.totalorder %s29, %s30
      %p41 = scmp.eq.s32.totalorder %s21, 0
      %p42 = por %p40, %p41
      %p43 = scmp.ne.s32.totalorder %s29, %s30
      %p44 = scmp.eq.s32.totalorder %s22, 1
      %p45 = por %p43, %p44
      %p47 = scmp.ne.s32.totalorder %s30, %s46
      %p48 = scmp.eq.s32.totalorder %s22, 0
      %p49 = por %p47, %p48
      %s51 = sadd.s32 %s50, 1
      %p54 = scmp.eq.s32.totalorder %s16, 1
      %p55 = scmp.ne.s32.totalorder %s50, %s52
      %p56 = scmp.eq.s32.totalorder %s16, 0
      %p57 = por %p55, %p56
      %p58 = scmp.ne.s32.totalorder %s50, %s52
      %p59 = scmp.eq.s32.totalorder %s21, 1
      %p60 = por %p58, %p59
      %p61 = scmp.ne.s32.totalorder %s52, %s53
      %p62 = scmp.eq.s32.totalorder %s21, 0
      %p63 = por %p61, %p62
      %p64 = scmp.ne.s32.totalorder %s52, %s53
      %p65 = scmp.eq.s32.totalorder %s22, 1
      %p66 = por %p64, %p65
      %p68 = scmp.ne.s32.totalorder %s53, %s67
      %p69 = scmp.eq.s32.totalorder %s22, 0
      %p70 = por %p68, %p69
      %s72 = sadd.s32 %s71, 1
      %p75 = scmp.eq.s32.totalorder %s16, 1
      %p76 = scmp.ne.s32.totalorder %s71, %s73
      %p77 = scmp.eq.s32.totalorder %s16, 0
      %p78 = por %p76, %p77
      %p79 = scmp.ne.s32.totalorder %s71, %s73
      %p80 = scmp.eq.s32.totalorder %s21, 1
      %p81 = por %p79, %p80
      %p82 = scmp.ne.s32.totalorder %s73, %s74
      %p83 = scmp.eq.s32.totalorder %s21, 0
      %p84 = por %p82, %p83
      %p85 = scmp.ne.s32.totalorder %s73, %s74
      %p86 = scmp.eq.s32.totalorder %s22, 1
      %p87 = por %p85, %p86
      %p89 = scmp.ne.s32.totalorder %s74, %s88
      %p90 = scmp.eq.s32.totalorder %s22, 0
      %p91 = por %p89, %p90
      %s93 = sadd.s32 %s92, 1
      %p96 = scmp.eq.s32.totalorder %s16, 1
      %p97 = scmp.ne.s32.totalorder %s92, %s94
      %p98 = scmp.eq.s32.totalorder %s16, 0
      %p99 = por %p97, %p98
      %p100 = scmp.ne.s32.totalorder %s92, %s94
      %p101 = scmp.eq.s32.totalorder %s21, 1
      %p102 = por %p100, %p101
      %p103 = scmp.ne.s32.totalorder %s94, %s95
      %p104 = scmp.eq.s32.totalorder %s21, 0
      %p105 = por %p103, %p104
      %p106 = scmp.ne.s32.totalorder %s94, %s95
      %p107 = scmp.eq.s32.totalorder %s22, 1
      %p108 = por %p106, %p107
      %p110 = scmp.ne.s32.totalorder %s95, %s109
      %p111 = scmp.eq.s32.totalorder %s22, 0
      %p112 = por %p110, %p111
      %s114 = sadd.s32 %s113, 1
      %p117 = scmp.eq.s32.totalorder %s16, 1
      %p118 = scmp.ne.s32.totalorder %s113, %s115
      %p119 = scmp.eq.s32.totalorder %s16, 0
      %p120 = por %p118, %p119
      %p121 = scmp.ne.s32.totalorder %s113, %s115
      %p122 = scmp.eq.s32.totalorder %s21, 1
      %p123 = por %p121, %p122
      %p124 = scmp.ne.s32.totalorder %s115, %s116
      %p125 = scmp.eq.s32.totalorder %s21, 0
      %p126 = por %p124, %p125
      %p127 = scmp.ne.s32.totalorder %s115, %s116
      %p128 = scmp.eq.s32.totalorder %s22, 1
      %p129 = por %p127, %p128
      %p131 = scmp.ne.s32.totalorder %s116, %s130
      %p132 = scmp.eq.s32.totalorder %s22, 0
      %p133 = por %p131, %p132
      %s135 = sadd.s32 %s134, 1
      %p138 = scmp.eq.s32.totalorder %s16, 1
      %p139 = scmp.ne.s32.totalorder %s134, %s136
      %p140 = scmp.eq.s32.totalorder %s16, 0
      %p141 = por %p139, %p140
      %p142 = scmp.ne.s32.totalorder %s134, %s136
      %p143 = scmp.eq.s32.totalorder %s21, 1
      %p144 = por %p142, %p143
      %p145 = scmp.ne.s32.totalorder %s136, %s137
      %p146 = scmp.eq.s32.totalorder %s21, 0
      %p147 = por %p145, %p146
      %p148 = scmp.ne.s32.totalorder %s136, %s137
      %p149 = scmp.eq.s32.totalorder %s22, 1
      %p150 = por %p148, %p149
      %p152 = scmp.ne.s32.totalorder %s137, %s151
      %p153 = scmp.eq.s32.totalorder %s22, 0
      %p154 = por %p152, %p153
      %s156 = sadd.s32 %s155, 1
      %p159 = scmp.eq.s32.totalorder %s16, 1
      %p160 = scmp.ne.s32.totalorder %s155, %s157
      %p161 = scmp.eq.s32.totalorder %s16, 0
      %p162 = por %p160, %p161
      %p163 = scmp.ne.s32.totalorder %s155, %s157
      %p164 = scmp.eq.s32.totalorder %s21, 1
      %p165 = por %p163, %p164
      %p166 = scmp.ne.s32.totalorder %s157, %s158
      %p167 = scmp.eq.s32.totalorder %s21, 0
      %p168 = por %p166, %p167
      %p169 = scmp.ne.s32.totalorder %s157, %s158
      %p170 = scmp.eq.s32.totalorder %s22, 1
      %p171 = por %p169, %p170
      %p173 = scmp.ne.s32.totalorder %s158, %s172
      %p174 = scmp.eq.s32.totalorder %s22, 0
      %p175 = por %p173, %p174
      %s176 = ssub.s32 %s16, %s23
      %p177 = scmp.eq.s32.totalorder %s176, 0
      %s179 = sadd.s32 %s178, 1
      %s180 = scalar_select %p177, %s178, %s179
      %p183 = pneg %p177
      %p184 = scmp.eq.s32.totalorder %s16, 1
      %p185 = por %p183, %p184
      %p186 = scmp.ne.s32.totalorder %s178, %s181
      %p187 = scmp.eq.s32.totalorder %s16, 0
      %p188 = por %p186, %p187
      %p189 = scmp.ne.s32.totalorder %s178, %s181
      %p190 = scmp.eq.s32.totalorder %s21, 1
      %p191 = por %p189, %p190
      %p192 = scmp.ne.s32.totalorder %s181, %s182
      %p193 = scmp.eq.s32.totalorder %s21, 0
      %p194 = por %p192, %p193
      %p195 = scmp.ne.s32.totalorder %s181, %s182
      %p196 = scmp.eq.s32.totalorder %s22, 1
      %p197 = por %p195, %p196
      %p199 = scmp.ne.s32.totalorder %s182, %s198
      %p200 = scmp.eq.s32.totalorder %s22, 0
      %p201 = por %p199, %p200
      %p202 = scmp.le.s32.totalorder 1, %s16
      %p203 = scmp.lt.s32.totalorder %s16, 3
      %p204 = pnand %p202, %p203
      %p205 = pneg %p204
      // Predicated region
      $region9: #{tpu_custom_call.1} parent=5 // pred_check
        _
      $region10: #{tpu_custom_call.1} parent=5 // pred_check_branch
        %207 = sbr.rel (%p204) target = $region12
      $region11: #{tpu_custom_call.1} parent=5 // pred_region
        %s208 = ssub.s32 %s16, 1
        // Predicated region
        $region13: #{tpu_custom_call.1} parent=11 // pred_check
          %p209 = pneg %p63
        $region14: #{tpu_custom_call.1} parent=11 // pred_check_branch
          %211 = sbr.rel (%p209) target = $region16
        $region15: #{tpu_custom_call.1} parent=11 // pred_region
          _
        $region16: #{tpu_custom_call.1} parent=11 // pred_fallthru
          _
        // Predicated region
        $region17: #{tpu_custom_call.1} parent=11 // pred_check
          %p212 = pneg %p84
        $region18: #{tpu_custom_call.1} parent=11 // pred_check_branch
          %214 = sbr.rel (%p212) target = $region20
        $region19: #{tpu_custom_call.1} parent=11 // pred_region
          _
        $region20: #{tpu_custom_call.1} parent=11 // pred_fallthru
          _
        // Predicated region
        $region21: #{tpu_custom_call.1} parent=11 // pred_check
          %p215 = pneg %p105
        $region22: #{tpu_custom_call.1} parent=11 // pred_check_branch
          %217 = sbr.rel (%p215) target = $region24
        $region23: #{tpu_custom_call.1} parent=11 // pred_region
          _
        $region24: #{tpu_custom_call.1} parent=11 // pred_fallthru
          _
        // Predicated region
        $region25: #{tpu_custom_call.1} parent=11 // pred_check
          %p218 = pneg %p126
        $region26: #{tpu_custom_call.1} parent=11 // pred_check_branch
          %220 = sbr.rel (%p218) target = $region28
        $region27: #{tpu_custom_call.1} parent=11 // pred_region
          _
        $region28: #{tpu_custom_call.1} parent=11 // pred_fallthru
          _
        // Predicated region
        $region29: #{tpu_custom_call.1} parent=11 // pred_check
          %p221 = pneg %p147
        $region30: #{tpu_custom_call.1} parent=11 // pred_check_branch
          %223 = sbr.rel (%p221) target = $region32
        $region31: #{tpu_custom_call.1} parent=11 // pred_region
          _
        $region32: #{tpu_custom_call.1} parent=11 // pred_fallthru
          _
        // Predicated region
        $region33: #{tpu_custom_call.1} parent=11 // pred_check
          %p224 = pneg %p168
        $region34: #{tpu_custom_call.1} parent=11 // pred_check_branch
          %226 = sbr.rel (%p224) target = $region36
        $region35: #{tpu_custom_call.1} parent=11 // pred_region
          _
        $region36: #{tpu_custom_call.1} parent=11 // pred_fallthru
          _
      $region12: #{tpu_custom_call.1} parent=5 // pred_fallthru
        _
      %p227 = scmp.lt.s32.totalorder %s16, 2
      // Predicated region
      $region37: #{tpu_custom_call.1} parent=5 // pred_check
        %p228 = pneg %p227
      $region38: #{tpu_custom_call.1} parent=5 // pred_check_branch
        %230 = sbr.rel (%p228) target = $region40
      $region39: #{tpu_custom_call.1} parent=5 // pred_region
        // Predicated region
        $region41: #{tpu_custom_call.1} parent=39 // pred_check
          %p231 = pneg %p36
        $region42: #{tpu_custom_call.1} parent=39 // pred_check_branch
          %233 = sbr.rel (%p231) target = $region44
        $region43: #{tpu_custom_call.1} parent=39 // pred_region
          %s234 = smul.u32 13, %s16
          %p235 = scmp.lt.s32.totalorder %s234, 25
          %s236 = scalar_select %p235, %s234, 25
          %s237 = smul.addr %s236, 8
          %s238 = scalar_lea.vmem %s0, %s237
          %s239 = smul.u32 13, %s16
        $region44: #{tpu_custom_call.1} parent=39 // pred_fallthru
          _
      $region40: #{tpu_custom_call.1} parent=5 // pred_fallthru
        _
      %p240 = scmp.le.s32.totalorder 1, %s16
      %p241 = scmp.lt.s32.totalorder %s16, 3
      %p242 = pnand %p240, %p241
      %p243 = pneg %p242
      // Predicated region
      $region45: #{tpu_custom_call.1} parent=5 // pred_check
        _
      $region46: #{tpu_custom_call.1} parent=5 // pred_check_branch
        %245 = sbr.rel (%p242) target = $region48
      $region47: #{tpu_custom_call.1} parent=5 // pred_region
        %s246 = ssub.s32 %s16, 1
        %s247 = smul.u32 13, %s21
        %p248 = scmp.lt.s32.totalorder %s247, 25
        %s249 = scalar_select %p248, %s247, 25
        %s250 = smul.addr %s249, 8
        %s251 = scalar_lea.vmem %s0, %s250
        %p252 = pneg %p42
        %p253 = pneg %p39
        %p254 = pneg %p63
        %p255 = pneg %p60
        %p256 = pneg %p84
        %p257 = pneg %p81
        %p258 = pneg %p105
        %p259 = pneg %p102
        %p260 = pneg %p126
        %p261 = pneg %p123
        %p262 = pneg %p147
        %p263 = pneg %p144
        %p264 = pneg %p168
        %p265 = pneg %p165
        %p266 = pneg %p194
        %p267 = pneg %p191
        %s268 = sand.u32 %s181, 1
        %s269 = scalar_lea.sflag [#allocation3], %s268
        %s270 = sand.u32 %s181, 1
        %s271 = smul.addr %s270, 104
        %s272 = scalar_lea.vmem [#allocation2], %s271
        %s273 = smul.u32 13, %s21
        %p274 = scmp.lt.s32.totalorder %s273, 25
        %s275 = scalar_select %p274, %s273, 25
        %s276 = smul.addr %s275, 8
        %s277 = scalar_lea.vmem %s0, %s276
        %s278 = smul.u32 13, %s21
        %s279 = smul.u32 13, %s21
        %v281 = vld [vmem:[%s277] sm:$0xff]
        %v282 = vld [vmem:[%s277 + $0x8] sm:$0xff]
        %v283 = vld [vmem:[%s277 + $0x10] sm:$0xff]
        %v284 = vld [vmem:[%s277 + $0x18] sm:$0xff]
        %v285 = vld [vmem:[%s277 + $0x20] sm:$0xff]
        %v286 = vld [vmem:[%s277 + $0x28] sm:$0xff]
        %v287 = vld [vmem:[%s277 + $0x30] sm:$0xff]
        %v288 = vld [vmem:[%s277 + $0x38] sm:$0xff]
        %v289 = vld [vmem:[%s277 + $0x40] sm:$0xff]
        %v290 = vld [vmem:[%s277 + $0x48] sm:$0xff]
        %v291 = vld [vmem:[%s277 + $0x50] sm:$0xff]
        %v292 = vld [vmem:[%s277 + $0x58] sm:$0xff]
        %v293 = vld [vmem:[%s277 + $0x60] sm:$0xff]
        %v294 = vmul.f32 %v281, 0.5
        %v295 = vmul.f32 %v282, 0.5
        %v296 = vmul.f32 %v283, 0.5
        %v297 = vmul.f32 %v284, 0.5
        %v298 = vmul.f32 %v285, 0.5
        %v299 = vmul.f32 %v286, 0.5
        %v300 = vmul.f32 %v287, 0.5
        %v301 = vmul.f32 %v288, 0.5
        %v302 = vmul.f32 %v289, 0.5
        %v303 = vmul.f32 %v290, 0.5
        %v304 = vmul.f32 %v291, 0.5
        %v305 = vmul.f32 %v292, 0.5
        %v306 = vmul.f32 %v293, 0.5
        %v307 = vtanh.pop %v294
        %v308 = vtanh.pop %v295
        %v309 = vtanh.pop %v296
        %v310 = vtanh.pop %v297
        %v311 = vtanh.pop %v298
        %v312 = vtanh.pop %v299
        %v313 = vtanh.pop %v300
        %v314 = vtanh.pop %v301
        %v315 = vtanh.pop %v302
        %v316 = vtanh.pop %v303
        %v317 = vtanh.pop %v304
        %v318 = vtanh.pop %v305
        %v319 = vtanh.pop %v306
        %v320 = vadd.f32 %v307, 1.0
        %v321 = vadd.f32 %v308, 1.0
        %v322 = vadd.f32 %v309, 1.0
        %v323 = vadd.f32 %v310, 1.0
        %v324 = vadd.f32 %v311, 1.0
        %v325 = vadd.f32 %v312, 1.0
        %v326 = vadd.f32 %v313, 1.0
        %v327 = vadd.f32 %v314, 1.0
        %v328 = vadd.f32 %v315, 1.0
        %v329 = vadd.f32 %v316, 1.0
        %v330 = vadd.f32 %v317, 1.0
        %v331 = vadd.f32 %v318, 1.0
        %v332 = vadd.f32 %v319, 1.0
        %v333 = vmul.f32 %v320, 0.5
        %v334 = vmul.f32 %v321, 0.5
        %v335 = vmul.f32 %v322, 0.5
        %v336 = vmul.f32 %v323, 0.5
        %v337 = vmul.f32 %v324, 0.5
        %v338 = vmul.f32 %v325, 0.5
        %v339 = vmul.f32 %v326, 0.5
        %v340 = vmul.f32 %v327, 0.5
        %v341 = vmul.f32 %v328, 0.5
        %v342 = vmul.f32 %v329, 0.5
        %v343 = vmul.f32 %v330, 0.5
        %v344 = vmul.f32 %v331, 0.5
        %v345 = vmul.f32 %v332, 0.5
        %v346 = vpack.c.bf16 %v334, %v333
        %v347 = vpack.c.bf16 %v336, %v335
        %v348 = vpack.c.bf16 %v338, %v337
        %v349 = vpack.c.bf16 %v340, %v339
        %v350 = vpack.c.bf16 %v342, %v341
        %v351 = vpack.c.bf16 %v344, %v343
        %v352 = vpack.c.bf16 %v345, %v345
        %v353 = vld [vmem:[%s1] sm:$0xf]
        %v354 = vld [vmem:[%s1 + $0x4] sm:$0xf]
        %v357 = vunpack.c.l.b16 %v353
        %v358 = vunpack.c.l.b16 %v354
        %v359 = vpack.c.b16 %v358, %v357
        %vm361 = vcmask 130048
        %v363 = vsel %vm361, %v346, 0
        %v366 = vsel %vm361, %v347, 0
        %v369 = vsel %vm361, %v348, 0
        %v372 = vsel %vm361, %v349, 0
        %v375 = vsel %vm361, %v350, 0
        %v378 = vsel %vm361, %v351, 0
        %v381 = vsel %vm361, %v352, 0
        %383 = vmatprep.subr.bf16.mxu0 0
        %384 = vmatpush1.bf16.msra.mxu0 %v359
        %385 = vmatprep.subr.bf16.mxu0 0
        %386 = vmatpush1.bf16.msra.mxu0 0
        %387 = vmatprep.subr.bf16.mxu0 0
        %388 = vmatpush1.bf16.msra.mxu0 0
        %389 = vmatprep.subr.bf16.mxu0 0
        %390 = vmatpush1.bf16.msra.mxu0 0
        %391 = vmatprep.subr.bf16.mxu0 0
        %392 = vmatpush1.bf16.msra.mxu0 0
        %393 = vmatprep.subr.bf16.mxu0 0
        %394 = vmatpush1.bf16.msra.mxu0 0
        %395 = vmatprep.subr.bf16.mxu0 0
        %396 = vmatpush1.bf16.msra.mxu0 0
        %397 = vmatprep.subr.bf16.mxu0 0
        %398 = vmatpush1.bf16.msra.mxu0 0
        %399 = vmatprep.subr.bf16.mxu0 0
        %400 = vmatpush1.bf16.msra.mxu0 0
        %401 = vmatprep.subr.bf16.mxu0 0
        %402 = vmatpush1.bf16.msra.mxu0 0
        %403 = vmatprep.subr.bf16.mxu0 0
        %404 = vmatpush1.bf16.msra.mxu0 0
        %405 = vmatprep.subr.bf16.mxu0 0
        %406 = vmatpush1.bf16.msra.mxu0 0
        %407 = vmatprep.subr.bf16.mxu0 0
        %408 = vmatpush1.bf16.msra.mxu0 0
        %409 = vmatprep.subr.bf16.mxu0 0
        %410 = vmatpush1.bf16.msra.mxu0 0
        %411 = vmatprep.subr.bf16.mxu0 0
        %412 = vmatpush1.bf16.msra.mxu0 0
        %413 = vmatprep.subr.bf16.mxu0 0
        %414 = vmatpush1.bf16.msra.mxu0 0
        %415 = vmatprep.mubr.bf16.mxu0 0
        %416 = vmatmul.mubr.bf16.gmra.mrb[0].mxu0 %v363
        %v417 = vpop.f32.mrb[0].mxu0
        %v418 = vadd.f32 0.0, %v417
        %v419 = vpop.f32.mrb[0].mxu0
        %v420 = vpop.f32.mrb[0].mxu0
        %v421 = vadd.f32 0.0, %v420
        %v422 = vpop.f32.mrb[0].mxu0
        %423 = vmatprep.mubr.bf16.mxu0 0
        %424 = vmatmul.mubr.bf16.gmra.mrb[0].mxu0 %v366
        %v425 = vpop.f32.mrb[0].mxu0
        %v426 = vadd.f32 0.0, %v425
        %v427 = vpop.f32.mrb[0].mxu0
        %v428 = vpop.f32.mrb[0].mxu0
        %v429 = vadd.f32 0.0, %v428
        %v430 = vpop.f32.mrb[0].mxu0
        %431 = vmatprep.mubr.bf16.mxu0 0
        %432 = vmatmul.mubr.bf16.gmra.mrb[0].mxu0 %v369
        %v433 = vpop.f32.mrb[0].mxu0
        %v434 = vadd.f32 0.0, %v433
        %v435 = vpop.f32.mrb[0].mxu0
        %v436 = vpop.f32.mrb[0].mxu0
        %v437 = vadd.f32 0.0, %v436
        %v438 = vpop.f32.mrb[0].mxu0
        %439 = vmatprep.mubr.bf16.mxu0 0
        %440 = vmatmul.mubr.bf16.gmra.mrb[0].mxu0 %v372
        %v441 = vpop.f32.mrb[0].mxu0
        %v442 = vadd.f32 0.0, %v441
        %v443 = vpop.f32.mrb[0].mxu0
        %v444 = vpop.f32.mrb[0].mxu0
        %v445 = vadd.f32 0.0, %v444
        %v446 = vpop.f32.mrb[0].mxu0
        %447 = vmatprep.mubr.bf16.mxu0 0
        %448 = vmatmul.mubr.bf16.gmra.mrb[0].mxu0 %v375
        %v449 = vpop.f32.mrb[0].mxu0
        %v450 = vadd.f32 0.0, %v449
        %v451 = vpop.f32.mrb[0].mxu0
        %v452 = vpop.f32.mrb[0].mxu0
        %v453 = vadd.f32 0.0, %v452
        %v454 = vpop.f32.mrb[0].mxu0
        %455 = vmatprep.mubr.bf16.mxu0 0
        %456 = vmatmul.mubr.bf16.gmra.mrb[0].mxu0 %v378
        %v457 = vpop.f32.mrb[0].mxu0
        %v458 = vadd.f32 0.0, %v457
        %v459 = vpop.f32.mrb[0].mxu0
        %v460 = vpop.f32.mrb[0].mxu0
        %v461 = vadd.f32 0.0, %v460
        %v462 = vpop.f32.mrb[0].mxu0
        %463 = vmatprep.mubr.bf16.mxu0 0
        %464 = vmatmul.mubr.bf16.gmra.mrb[0].mxu0 %v381
        %v465 = vpop.f32.mrb[0].mxu0
        %v466 = vadd.f32 0.0, %v465
        %v467 = vpop.f32.mrb[0].mxu0
        %v468 = vpop.f32.mrb[0].mxu0
        %v469 = vpop.f32.mrb[0].mxu0
        %470 = vdwg.mxu0
        %v471 = vld [vmem:[%s2] sm:$0xf]
        %v472 = vld [vmem:[%s2 + $0x4] sm:$0xf]
        %v475 = vunpack.c.l.b16 %v471
        %v476 = vunpack.c.l.b16 %v472
        %v477 = vpack.c.b16 %v476, %v475
        %479 = vmatprep.subr.bf16.mxu0 0
        %480 = vmatpush1.bf16.msra.mxu0 %v477
        %481 = vmatprep.subr.bf16.mxu0 0
        %482 = vmatpush1.bf16.msra.mxu0 0
        %483 = vmatprep.subr.bf16.mxu0 0
        %484 = vmatpush1.bf16.msra.mxu0 0
        %485 = vmatprep.subr.bf16.mxu0 0
        %486 = vmatpush1.bf16.msra.mxu0 0
        %487 = vmatprep.subr.bf16.mxu0 0
        %488 = vmatpush1.bf16.msra.mxu0 0
        %489 = vmatprep.subr.bf16.mxu0 0
        %490 = vmatpush1.bf16.msra.mxu0 0
        %491 = vmatprep.subr.bf16.mxu0 0
        %492 = vmatpush1.bf16.msra.mxu0 0
        %493 = vmatprep.subr.bf16.mxu0 0
        %494 = vmatpush1.bf16.msra.mxu0 0
        %495 = vmatprep.subr.bf16.mxu0 0
        %496 = vmatpush1.bf16.msra.mxu0 0
        %497 = vmatprep.subr.bf16.mxu0 0
        %498 = vmatpush1.bf16.msra.mxu0 0
        %499 = vmatprep.subr.bf16.mxu0 0
        %500 = vmatpush1.bf16.msra.mxu0 0
        %501 = vmatprep.subr.bf16.mxu0 0
        %502 = vmatpush1.bf16.msra.mxu0 0
        %503 = vmatprep.subr.bf16.mxu0 0
        %504 = vmatpush1.bf16.msra.mxu0 0
        %505 = vmatprep.subr.bf16.mxu0 0
        %506 = vmatpush1.bf16.msra.mxu0 0
        %507 = vmatprep.subr.bf16.mxu0 0
        %508 = vmatpush1.bf16.msra.mxu0 0
        %509 = vmatprep.subr.bf16.mxu0 0
        %510 = vmatpush1.bf16.msra.mxu0 0
        %511 = vmatprep.mubr.bf16.mxu0 0
        %512 = vmatmul.mubr.bf16.gmra.mrb[0].mxu0 %v363
        %v513 = vpop.f32.mrb[0].mxu0
        %v514 = vadd.f32 0.0, %v513
        %v515 = vpop.f32.mrb[0].mxu0
        %v516 = vpop.f32.mrb[0].mxu0
        %v517 = vadd.f32 0.0, %v516
        %v518 = vpop.f32.mrb[0].mxu0
        %519 = vmatprep.mubr.bf16.mxu0 0
        %520 = vmatmul.mubr.bf16.gmra.mrb[0].mxu0 %v366
        %v521 = vpop.f32.mrb[0].mxu0
        %v522 = vadd.f32 0.0, %v521
        %v523 = vpop.f32.mrb[0].mxu0
        %v524 = vpop.f32.mrb[0].mxu0
        %v525 = vadd.f32 0.0, %v524
        %v526 = vpop.f32.mrb[0].mxu0
        %527 = vmatprep.mubr.bf16.mxu0 0
        %528 = vmatmul.mubr.bf16.gmra.mrb[0].mxu0 %v369
        %v529 = vpop.f32.mrb[0].mxu0
        %v530 = vadd.f32 0.0, %v529
        %v531 = vpop.f32.mrb[0].mxu0
        %v532 = vpop.f32.mrb[0].mxu0
        %v533 = vadd.f32 0.0, %v532
        %v534 = vpop.f32.mrb[0].mxu0
        %535 = vmatprep.mubr.bf16.mxu0 0
        %536 = vmatmul.mubr.bf16.gmra.mrb[0].mxu0 %v372
        %v537 = vpop.f32.mrb[0].mxu0
        %v538 = vadd.f32 0.0, %v537
        %v539 = vpop.f32.mrb[0].mxu0
        %v540 = vpop.f32.mrb[0].mxu0
        %v541 = vadd.f32 0.0, %v540
        %v542 = vpop.f32.mrb[0].mxu0
        %543 = vmatprep.mubr.bf16.mxu0 0
        %544 = vmatmul.mubr.bf16.gmra.mrb[0].mxu0 %v375
        %v545 = vpop.f32.mrb[0].mxu0
        %v546 = vadd.f32 0.0, %v545
        %v547 = vpop.f32.mrb[0].mxu0
        %v548 = vpop.f32.mrb[0].mxu0
        %v549 = vadd.f32 0.0, %v548
        %v550 = vpop.f32.mrb[0].mxu0
        %551 = vmatprep.mubr.bf16.mxu0 0
        %552 = vmatmul.mubr.bf16.gmra.mrb[0].mxu0 %v378
        %v553 = vpop.f32.mrb[0].mxu0
        %v554 = vadd.f32 0.0, %v553
        %v555 = vpop.f32.mrb[0].mxu0
        %v556 = vpop.f32.mrb[0].mxu0
        %v557 = vadd.f32 0.0, %v556
        %v558 = vpop.f32.mrb[0].mxu0
        %559 = vmatprep.mubr.bf16.mxu0 0
        %560 = vmatmul.mubr.bf16.gmra.mrb[0].mxu0 %v381
        %v561 = vpop.f32.mrb[0].mxu0
        %v562 = vadd.f32 0.0, %v561
        %v563 = vpop.f32.mrb[0].mxu0
        %v564 = vpop.f32.mrb[0].mxu0
        %v565 = vpop.f32.mrb[0].mxu0
        %566 = vdwg.mxu0
        %v567 = vmul.f32 %v418, %v514
        %v568 = vmul.f32 %v421, %v517
        %v569 = vmul.f32 %v426, %v522
        %v570 = vmul.f32 %v429, %v525
        %v571 = vmul.f32 %v434, %v530
        %v572 = vmul.f32 %v437, %v533
        %v573 = vmul.f32 %v442, %v538
        %v574 = vmul.f32 %v445, %v541
        %v575 = vmul.f32 %v450, %v546
        %v576 = vmul.f32 %v453, %v549
        %v577 = vmul.f32 %v458, %v554
        %v578 = vmul.f32 %v461, %v557
        %v579 = vmul.f32 %v466, %v562
        %v580 = vpack.c.bf16 %v568, %v567
        %v581 = vpack.c.bf16 %v570, %v569
        %v582 = vpack.c.bf16 %v572, %v571
        %v583 = vpack.c.bf16 %v574, %v573
        %v584 = vpack.c.bf16 %v576, %v575
        %v585 = vpack.c.bf16 %v578, %v577
        %v586 = vpack.c.bf16 %v579, %v579
        %v587 = vld [vmem:[%s3] sm:$0xf]
        %v588 = vld [vmem:[%s3 + $0x4] sm:$0xf]
        %v589 = vld [vmem:[%s3 + $0x8] sm:$0xf]
        %v590 = vld [vmem:[%s3 + $0xc] sm:$0xf]
        %v591 = vld [vmem:[%s3 + $0x10] sm:$0xf]
        %v592 = vld [vmem:[%s3 + $0x14] sm:$0xf]
        %v593 = vld [vmem:[%s3 + $0x18] sm:$0xf]
        %v594 = vld [vmem:[%s3 + $0x1c] sm:$0xf]
        %v595 = vld [vmem:[%s4] sm:$0x1]
        %v597 = vlaneseq
        %v598 = vshrl.u32 %v597, 7
        %v599 = vsub.s32 0, %v598
        %v600 = vrot.slane %v595, %v599
        %v610 = vunpack.c.l.b16 %v587
        %v611 = vunpack.c.l.b16 %v588
        %v612 = vunpack.c.l.b16 %v589
        %v613 = vunpack.c.l.b16 %v590
        %v614 = vunpack.c.l.b16 %v591
        %v615 = vunpack.c.l.b16 %v592
        %v616 = vunpack.c.l.b16 %v593
        %v617 = vunpack.c.l.b16 %v594
        %v618 = vpack.c.b16 %v611, %v610
        %v619 = vpack.c.b16 %v613, %v612
        %v620 = vpack.c.b16 %v615, %v614
        %v621 = vpack.c.b16 %v617, %v616
        %vm626 = vcmask 523264
        %v628 = vsel %vm626, %v580, 0
        %v631 = vsel %vm626, %v581, 0
        %v634 = vsel %vm626, %v582, 0
        %v637 = vsel %vm626, %v583, 0
        %v640 = vsel %vm626, %v584, 0
        %v643 = vsel %vm626, %v585, 0
        %v646 = vsel %vm626, %v586, 0
        %648 = vmatprep.subr.bf16.mxu0 0
        %649 = vmatpush1.bf16.msra.mxu0 %v618
        %650 = vmatprep.subr.bf16.mxu0 0
        %651 = vmatpush1.bf16.msra.mxu0 %v619
        %652 = vmatprep.subr.bf16.mxu0 0
        %653 = vmatpush1.bf16.msra.mxu0 %v620
        %654 = vmatprep.subr.bf16.mxu0 0
        %655 = vmatpush1.bf16.msra.mxu0 %v621
        %656 = vmatprep.subr.bf16.mxu0 0
        %657 = vmatpush1.bf16.msra.mxu0 0
        %658 = vmatprep.subr.bf16.mxu0 0
        %659 = vmatpush1.bf16.msra.mxu0 0
        %660 = vmatprep.subr.bf16.mxu0 0
        %661 = vmatpush1.bf16.msra.mxu0 0
        %662 = vmatprep.subr.bf16.mxu0 0
        %663 = vmatpush1.bf16.msra.mxu0 0
        %664 = vmatprep.subr.bf16.mxu0 0
        %665 = vmatpush1.bf16.msra.mxu0 0
        %666 = vmatprep.subr.bf16.mxu0 0
        %667 = vmatpush1.bf16.msra.mxu0 0
        %668 = vmatprep.subr.bf16.mxu0 0
        %669 = vmatpush1.bf16.msra.mxu0 0
        %670 = vmatprep.subr.bf16.mxu0 0
        %671 = vmatpush1.bf16.msra.mxu0 0
        %672 = vmatprep.subr.bf16.mxu0 0
        %673 = vmatpush1.bf16.msra.mxu0 0
        %674 = vmatprep.subr.bf16.mxu0 0
        %675 = vmatpush1.bf16.msra.mxu0 0
        %676 = vmatprep.subr.bf16.mxu0 0
        %677 = vmatpush1.bf16.msra.mxu0 0
        %678 = vmatprep.subr.bf16.mxu0 0
        %679 = vmatpush1.bf16.msra.mxu0 0
        %680 = vmatprep.mubr.bf16.mxu0 0
        %681 = vmatmul.mubr.bf16.gmra.mrb[0].mxu0 %v628
        %v682 = vpop.f32.mrb[0].mxu0
        %v683 = vadd.f32 %v600, %v682
        %v684 = vpop.f32.mrb[0].mxu0
        %v685 = vpop.f32.mrb[0].mxu0
        %v686 = vadd.f32 %v600, %v685
        %v687 = vpop.f32.mrb[0].mxu0
        %688 = vmatprep.mubr.bf16.mxu0 0
        %689 = vmatmul.mubr.bf16.gmra.mrb[0].mxu0 %v631
        %v690 = vpop.f32.mrb[0].mxu0
        %v691 = vadd.f32 %v600, %v690
        %v692 = vpop.f32.mrb[0].mxu0
        %v693 = vpop.f32.mrb[0].mxu0
        %v694 = vadd.f32 %v600, %v693
        %v695 = vpop.f32.mrb[0].mxu0
        %696 = vmatprep.mubr.bf16.mxu0 0
        %697 = vmatmul.mubr.bf16.gmra.mrb[0].mxu0 %v634
        %v698 = vpop.f32.mrb[0].mxu0
        %v699 = vadd.f32 %v600, %v698
        %v700 = vpop.f32.mrb[0].mxu0
        %v701 = vpop.f32.mrb[0].mxu0
        %v702 = vadd.f32 %v600, %v701
        %v703 = vpop.f32.mrb[0].mxu0
        %704 = vmatprep.mubr.bf16.mxu0 0
        %705 = vmatmul.mubr.bf16.gmra.mrb[0].mxu0 %v637
        %v706 = vpop.f32.mrb[0].mxu0
        %v707 = vadd.f32 %v600, %v706
        %v708 = vpop.f32.mrb[0].mxu0
        %v709 = vpop.f32.mrb[0].mxu0
        %v710 = vadd.f32 %v600, %v709
        %v711 = vpop.f32.mrb[0].mxu0
        %712 = vmatprep.mubr.bf16.mxu0 0
        %713 = vmatmul.mubr.bf16.gmra.mrb[0].mxu0 %v640
        %v714 = vpop.f32.mrb[0].mxu0
        %v715 = vadd.f32 %v600, %v714
        %v716 = vpop.f32.mrb[0].mxu0
        %v717 = vpop.f32.mrb[0].mxu0
        %v718 = vadd.f32 %v600, %v717
        %v719 = vpop.f32.mrb[0].mxu0
        %720 = vmatprep.mubr.bf16.mxu0 0
        %721 = vmatmul.mubr.bf16.gmra.mrb[0].mxu0 %v643
        %v722 = vpop.f32.mrb[0].mxu0
        %v723 = vadd.f32 %v600, %v722
        %v724 = vpop.f32.mrb[0].mxu0
        %v725 = vpop.f32.mrb[0].mxu0
        %v726 = vadd.f32 %v600, %v725
        %v727 = vpop.f32.mrb[0].mxu0
        %728 = vmatprep.mubr.bf16.mxu0 0
        %729 = vmatmul.mubr.bf16.gmra.mrb[0].mxu0 %v646
        %v730 = vpop.f32.mrb[0].mxu0
        %v731 = vadd.f32 %v600, %v730
        %v732 = vpop.f32.mrb[0].mxu0
        %v733 = vpop.f32.mrb[0].mxu0
        %v734 = vpop.f32.mrb[0].mxu0
        %735 = vdwg.mxu0
        %vm736 = vcmp.ge.f32.partialorder %v683, 0.0
        %vm737 = vcmp.ge.f32.partialorder %v686, 0.0
        %vm738 = vcmp.ge.f32.partialorder %v691, 0.0
        %vm739 = vcmp.ge.f32.partialorder %v694, 0.0
        %vm740 = vcmp.ge.f32.partialorder %v699, 0.0
        %vm741 = vcmp.ge.f32.partialorder %v702, 0.0
        %vm742 = vcmp.ge.f32.partialorder %v707, 0.0
        %vm743 = vcmp.ge.f32.partialorder %v710, 0.0
        %vm744 = vcmp.ge.f32.partialorder %v715, 0.0
        %vm745 = vcmp.ge.f32.partialorder %v718, 0.0
        %vm746 = vcmp.ge.f32.partialorder %v723, 0.0
        %vm747 = vcmp.ge.f32.partialorder %v726, 0.0
        %vm748 = vcmp.ge.f32.partialorder %v731, 0.0
        %v749 = vmul.f32 %v683, 0.25
        %v750 = vmul.f32 %v686, 0.25
        %v751 = vmul.f32 %v691, 0.25
        %v752 = vmul.f32 %v694, 0.25
        %v753 = vmul.f32 %v699, 0.25
        %v754 = vmul.f32 %v702, 0.25
        %v755 = vmul.f32 %v707, 0.25
        %v756 = vmul.f32 %v710, 0.25
        %v757 = vmul.f32 %v715, 0.25
        %v758 = vmul.f32 %v718, 0.25
        %v759 = vmul.f32 %v723, 0.25
        %v760 = vmul.f32 %v726, 0.25
        %v761 = vmul.f32 %v731, 0.25
        %v762 = vsel %vm736, %v683, %v749
        %v763 = vsel %vm737, %v686, %v750
        %v764 = vsel %vm738, %v691, %v751
        %v765 = vsel %vm739, %v694, %v752
        %v766 = vsel %vm740, %v699, %v753
        %v767 = vsel %vm741, %v702, %v754
        %v768 = vsel %vm742, %v707, %v755
        %v769 = vsel %vm743, %v710, %v756
        %v770 = vsel %vm744, %v715, %v757
        %v771 = vsel %vm745, %v718, %v758
        %v772 = vsel %vm746, %v723, %v759
        %v773 = vsel %vm747, %v726, %v760
        %v774 = vsel %vm748, %v731, %v761
        %v775 = vpack.c.bf16 %v763, %v762
        %v776 = vpack.c.bf16 %v765, %v764
        %v777 = vpack.c.bf16 %v767, %v766
        %v778 = vpack.c.bf16 %v769, %v768
        %v779 = vpack.c.bf16 %v771, %v770
        %v780 = vpack.c.bf16 %v773, %v772
        %v781 = vpack.c.bf16 %v774, %v774
        %v782 = vld [vmem:[%s5] sm:$0xf]
        %v783 = vld [vmem:[%s5 + $0x4] sm:$0xf]
        %v784 = vld [vmem:[%s5 + $0x8] sm:$0xf]
        %v785 = vld [vmem:[%s5 + $0xc] sm:$0xf]
        %v786 = vld [vmem:[%s5 + $0x10] sm:$0xf]
        %v787 = vld [vmem:[%s5 + $0x14] sm:$0xf]
        %v788 = vld [vmem:[%s5 + $0x18] sm:$0xf]
        %v789 = vld [vmem:[%s5 + $0x1c] sm:$0xf]
        %v790 = vld [vmem:[%s5 + $0x20] sm:$0xf]
        %v791 = vld [vmem:[%s5 + $0x24] sm:$0xf]
        %v792 = vld [vmem:[%s5 + $0x28] sm:$0xf]
        %v793 = vld [vmem:[%s5 + $0x2c] sm:$0xf]
        %v794 = vld [vmem:[%s5 + $0x30] sm:$0xf]
        %v795 = vld [vmem:[%s5 + $0x34] sm:$0xf]
        %v796 = vld [vmem:[%s5 + $0x38] sm:$0xf]
        %v797 = vld [vmem:[%s5 + $0x3c] sm:$0xf]
        %v798 = vld [vmem:[%s6] sm:$0x1]
        %v800 = vlaneseq
        %v801 = vshrl.u32 %v800, 7
        %v802 = vsub.s32 0, %v801
        %v803 = vrot.slane %v798, %v802
        %v821 = vunpack.c.l.b16 %v782
        %v822 = vunpack.c.l.b16 %v783
        %v823 = vunpack.c.l.b16 %v784
        %v824 = vunpack.c.l.b16 %v785
        %v825 = vunpack.c.l.b16 %v786
        %v826 = vunpack.c.l.b16 %v787
        %v827 = vunpack.c.l.b16 %v788
        %v828 = vunpack.c.l.b16 %v789
        %v829 = vunpack.c.l.b16 %v790
        %v830 = vunpack.c.l.b16 %v791
        %v831 = vunpack.c.l.b16 %v792
        %v832 = vunpack.c.l.b16 %v793
        %v833 = vunpack.c.l.b16 %v794
        %v834 = vunpack.c.l.b16 %v795
        %v835 = vunpack.c.l.b16 %v796
        %v836 = vunpack.c.l.b16 %v797
        %v837 = vpack.c.b16 %v822, %v821
        %v838 = vpack.c.b16 %v824, %v823
        %v839 = vpack.c.b16 %v826, %v825
        %v840 = vpack.c.b16 %v828, %v827
        %v841 = vpack.c.b16 %v830, %v829
        %v842 = vpack.c.b16 %v832, %v831
        %v843 = vpack.c.b16 %v834, %v833
        %v844 = vpack.c.b16 %v836, %v835
        %853 = vmatprep.subr.bf16.mxu0 0
        %854 = vmatpush1.bf16.msra.mxu0 %v837
        %855 = vmatprep.subr.bf16.mxu0 0
        %856 = vmatpush1.bf16.msra.mxu0 %v838
        %857 = vmatprep.subr.bf16.mxu0 0
        %858 = vmatpush1.bf16.msra.mxu0 %v839
        %859 = vmatprep.subr.bf16.mxu0 0
        %860 = vmatpush1.bf16.msra.mxu0 %v840
        %861 = vmatprep.subr.bf16.mxu0 0
        %862 = vmatpush1.bf16.msra.mxu0 %v841
        %863 = vmatprep.subr.bf16.mxu0 0
        %864 = vmatpush1.bf16.msra.mxu0 %v842
        %865 = vmatprep.subr.bf16.mxu0 0
        %866 = vmatpush1.bf16.msra.mxu0 %v843
        %867 = vmatprep.subr.bf16.mxu0 0
        %868 = vmatpush1.bf16.msra.mxu0 %v844
        %869 = vmatprep.subr.bf16.mxu0 0
        %870 = vmatpush1.bf16.msra.mxu0 0
        %871 = vmatprep.subr.bf16.mxu0 0
        %872 = vmatpush1.bf16.msra.mxu0 0
        %873 = vmatprep.subr.bf16.mxu0 0
        %874 = vmatpush1.bf16.msra.mxu0 0
        %875 = vmatprep.subr.bf16.mxu0 0
        %876 = vmatpush1.bf16.msra.mxu0 0
        %877 = vmatprep.subr.bf16.mxu0 0
        %878 = vmatpush1.bf16.msra.mxu0 0
        %879 = vmatprep.subr.bf16.mxu0 0
        %880 = vmatpush1.bf16.msra.mxu0 0
        %881 = vmatprep.subr.bf16.mxu0 0
        %882 = vmatpush1.bf16.msra.mxu0 0
        %883 = vmatprep.subr.bf16.mxu0 0
        %884 = vmatpush1.bf16.msra.mxu0 0
        %885 = vmatprep.mubr.bf16.mxu0 0
        %886 = vmatmul.mubr.bf16.gmra.mrb[0].mxu0 %v775
        %v887 = vpop.f32.mrb[0].mxu0
        %v888 = vadd.f32 %v803, %v887
        %v889 = vpop.f32.mrb[0].mxu0
        %v890 = vpop.f32.mrb[0].mxu0
        %v891 = vadd.f32 %v803, %v890
        %v892 = vpop.f32.mrb[0].mxu0
        %893 = vmatprep.mubr.bf16.mxu0 0
        %894 = vmatmul.mubr.bf16.gmra.mrb[0].mxu0 %v776
        %v895 = vpop.f32.mrb[0].mxu0
        %v896 = vadd.f32 %v803, %v895
        %v897 = vpop.f32.mrb[0].mxu0
        %v898 = vpop.f32.mrb[0].mxu0
        %v899 = vadd.f32 %v803, %v898
        %v900 = vpop.f32.mrb[0].mxu0
        %901 = vmatprep.mubr.bf16.mxu0 0
        %902 = vmatmul.mubr.bf16.gmra.mrb[0].mxu0 %v777
        %v903 = vpop.f32.mrb[0].mxu0
        %v904 = vadd.f32 %v803, %v903
        %v905 = vpop.f32.mrb[0].mxu0
        %v906 = vpop.f32.mrb[0].mxu0
        %v907 = vadd.f32 %v803, %v906
        %v908 = vpop.f32.mrb[0].mxu0
        %909 = vmatprep.mubr.bf16.mxu0 0
        %910 = vmatmul.mubr.bf16.gmra.mrb[0].mxu0 %v778
        %v911 = vpop.f32.mrb[0].mxu0
        %v912 = vadd.f32 %v803, %v911
        %v913 = vpop.f32.mrb[0].mxu0
        %v914 = vpop.f32.mrb[0].mxu0
        %v915 = vadd.f32 %v803, %v914
        %v916 = vpop.f32.mrb[0].mxu0
        %917 = vmatprep.mubr.bf16.mxu0 0
        %918 = vmatmul.mubr.bf16.gmra.mrb[0].mxu0 %v779
        %v919 = vpop.f32.mrb[0].mxu0
        %v920 = vadd.f32 %v803, %v919
        %v921 = vpop.f32.mrb[0].mxu0
        %v922 = vpop.f32.mrb[0].mxu0
        %v923 = vadd.f32 %v803, %v922
        %v924 = vpop.f32.mrb[0].mxu0
        %925 = vmatprep.mubr.bf16.mxu0 0
        %926 = vmatmul.mubr.bf16.gmra.mrb[0].mxu0 %v780
        %v927 = vpop.f32.mrb[0].mxu0
        %v928 = vadd.f32 %v803, %v927
        %v929 = vpop.f32.mrb[0].mxu0
        %v930 = vpop.f32.mrb[0].mxu0
        %v931 = vadd.f32 %v803, %v930
        %v932 = vpop.f32.mrb[0].mxu0
        %933 = vmatprep.mubr.bf16.mxu0 0
        %934 = vmatmul.mubr.bf16.gmra.mrb[0].mxu0 %v781
        %v935 = vpop.f32.mrb[0].mxu0
        %v936 = vadd.f32 %v803, %v935
        %v937 = vpop.f32.mrb[0].mxu0
        %v938 = vpop.f32.mrb[0].mxu0
        %v939 = vpop.f32.mrb[0].mxu0
        %940 = vdwg.mxu0
        %941 = vst [vmem:[%s272] sm:$0xff] %v888
        %942 = vst [vmem:[%s272 + $0x8] sm:$0xff] %v891
        %943 = vst [vmem:[%s272 + $0x10] sm:$0xff] %v896
        %944 = vst [vmem:[%s272 + $0x18] sm:$0xff] %v899
        %945 = vst [vmem:[%s272 + $0x20] sm:$0xff] %v904
        %946 = vst [vmem:[%s272 + $0x28] sm:$0xff] %v907
        %947 = vst [vmem:[%s272 + $0x30] sm:$0xff] %v912
        %948 = vst [vmem:[%s272 + $0x38] sm:$0xff] %v915
        %949 = vst [vmem:[%s272 + $0x40] sm:$0xff] %v920
        %950 = vst [vmem:[%s272 + $0x48] sm:$0xff] %v923
        %951 = vst [vmem:[%s272 + $0x50] sm:$0xff] %v928
        %952 = vst [vmem:[%s272 + $0x58] sm:$0xff] %v931
        %953 = vst [vmem:[%s272 + $0x60] sm:$0xff] %v936
        %s954 = sand.u32 %s181, 1
        %s955 = scalar_lea.sflag [#allocation3], %s954
        %s956 = sand.u32 %s181, 1
        %s957 = smul.addr %s956, 104
        %s958 = scalar_lea.vmem [#allocation2], %s957
        // Predicated region
        $region49: #{tpu_custom_call.1} parent=47 // pred_check
          %p959 = pneg %p191
        $region50: #{tpu_custom_call.1} parent=47 // pred_check_branch
          %961 = sbr.rel (%p959) target = $region52
        $region51: #{tpu_custom_call.1} parent=47 // pred_region
          %s962 = smul.u32 13, %s21
          %s964 = ssub.s32 1664, 1664
          %965 = vsyncadd %s955, %s964
          %s966 = smul.addr %s962, 128
          %s967 = scalar_lea.hbm %s7, %s966
          %s968 = sshll.u32 %s958, 4
          %s969 = int_to_ptr.vmem [resolvable:$true] %s968
          %974 = dma.vmem_to_hbm [thread:$0]  %s969, 1664, %s967, %s955, 128, 128, 8
        $region52: #{tpu_custom_call.1} parent=47 // pred_fallthru
          _
      $region48: #{tpu_custom_call.1} parent=5 // pred_fallthru
        _
      %p975 = scmp.le.s32.totalorder 2, %s16
      // Predicated region
      $region53: #{tpu_custom_call.1} parent=5 // pred_check
        %p976 = pneg %p975
      $region54: #{tpu_custom_call.1} parent=5 // pred_check_branch
        %978 = sbr.rel (%p976) target = $region56
      $region55: #{tpu_custom_call.1} parent=5 // pred_region
        %s979 = ssub.s32 %s16, 2
        // Predicated region
        $region57: #{tpu_custom_call.1} parent=55 // pred_check
          %p980 = pneg %p197
        $region58: #{tpu_custom_call.1} parent=55 // pred_check_branch
          %982 = sbr.rel (%p980) target = $region60
        $region59: #{tpu_custom_call.1} parent=55 // pred_region
          %s983 = sand.u32 %s182, 1
          %s984 = scalar_lea.sflag [#allocation3], %s983
          %s985 = sand.u32 %s182, 1
          %s986 = smul.addr %s985, 104
          %s987 = scalar_lea.vmem [#allocation2], %s986
          %988 = dma.done %s984, 1664
        $region60: #{tpu_custom_call.1} parent=55 // pred_fallthru
          _
      $region56: #{tpu_custom_call.1} parent=5 // pred_fallthru
        _
    $region6: #{tpu_custom_call.1} parent=1 // loop_footer
      %s20 = sadd.s32 1, %s16
    $region7: #{tpu_custom_call.1} parent=1 // loop_footer_branch
      %15 = sbr.rel target = $region3
    $region8: #{tpu_custom_call.1} parent=1 // loop_exit
      _
    %989 = vsyncpa [#allocation3], 1
    %s990 = scalar_lea.sflag [#allocation3], 1
    %991 = vsyncpa %s990, 1

</llo_original>
